<compile_context>
chip_gen: v7x
topology: tpu7x:2x2x1
jax: 0.10.0
libtpu: 0.0.40
codegen_flags: <defaults>
</compile_context>

<pallas_src>
import jax
import jax.numpy as jnp
from jax import lax
from jax.experimental import pallas as pl
from jax.experimental.pallas import tpu as pltpu


def pam_kernel(x_ref, xp_ref, wq_ref, bq_ref, wk_ref, bk_ref, out_ref):
    # x arrives in f32 (no host-side bf16 sweep); cast the tile just before the
    # MXU dots.  Elementwise softmax math stays in f32 (v5e has no bf16 VPU/EUP).
    x = x_ref[...].astype(jnp.bfloat16)       # (C, TQ)
    xp = xp_ref[...]                          # (C, PP) bf16, pooled positions
    wq = wq_ref[...]                          # (K, C)  bf16 (BN folded)
    bq = bq_ref[...]                          # (K, 1)  f32
    wk = wk_ref[...]                          # (K, C)  bf16 (BN folded)
    bk = bk_ref[...]                          # (K, 1)  f32

    # 1x1 conv (+ folded BN) + ReLU, channel-major so the token axis stays on
    # lanes.  bf16 operands, f32 accumulation on the MXU.
    qT = jnp.maximum(jnp.dot(wq, x, preferred_element_type=jnp.float32) + bq, 0.0)    # (K, TQ)
    kT = jnp.maximum(jnp.dot(wk, xp, preferred_element_type=jnp.float32) + bk, 0.0)   # (K, PP)

    kT_b = kT.astype(jnp.bfloat16)
    qT_b = qT.astype(jnp.bfloat16)

    # energy^T[p, n] = sum_k kT[k, p] * qT[k, n] -> (PP, TQ).  Contract over K
    # directly (no explicit XLU transpose); Mosaic picks the MXU orientation.
    energyT = lax.dot_general(kT_b, qT_b,
                              dimension_numbers=(((0,), (0,)), ((), ())),
                              preferred_element_type=jnp.float32)                     # (PP, TQ)

    # Softmax over the pooled-position axis (axis 0), f32 elementwise math.
    m = jnp.max(energyT, axis=0, keepdims=True)                                       # (1, TQ)
    e = jnp.exp(energyT - m)                                                           # (PP, TQ)
    inv_l = pl.reciprocal(jnp.sum(e, axis=0, keepdims=True), approx=True)              # (1, TQ), EUP

    # Normalize AFTER the value matmul: (kT @ e) * inv_l == kT @ softmax(energy)^T.
    outT = jnp.dot(kT_b, e.astype(jnp.bfloat16), preferred_element_type=jnp.float32)   # (K, TQ)
    outT = outT * inv_l + qT                                                            # + proj_query0 residual
    out_ref[...] = outT.astype(out_ref.dtype)                                           # lane-dense store


def _choose_tile_hw(HW, C, K, B, *, out_itemsize, max_tq=2048,
                    vmem_budget=40 * 1024 * 1024, min_total_tiles=8):
    """Pick the token-tile width: as big as the VMEM budget allows (amortizes the
    ~0.35 us per-grid-step overhead), capped so B * n_tiles still feeds both v7x
    TensorCores, and 128-lane aligned so only the last tile may be ragged."""
    per_tok = 2 * C * 4 + 2 * K * out_itemsize      # double-buffered x (f32) + out blocks
    tq = min(max_tq, max(128, vmem_budget // max(per_tok, 1)), HW)
    want_tiles = max(1, -(-min_total_tiles // B))   # ceil(min_total_tiles / B)
    if HW > 128 * want_tiles:
        tq = min(tq, -(-HW // want_tiles))
    if tq >= HW:
        return HW
    return max(128, (tq // 128) * 128)


def pam_forward(x, params, key_dim, pool_size, *, out_dtype=jnp.bfloat16):
    """x: (B, C, H, W) float32.  Returns (B, key_dim, H, W) in `out_dtype`
    (bf16 by default to halve writeback; pass jnp.float32 if downstream needs it)."""
    B, C, H, W = x.shape
    P = pool_size
    HW, PP = H * W, P * P
    assert H % P == 0 and W % P == 0, "adaptive pool assumes divisible spatial dims"
    K = key_dim

    # AdaptiveAvgPool2d(pool_size) == exact window means when P | H, W (XLA glue).
    # TODO(synk): this is a second full HBM sweep over x; a fused pool prologue
    # would not beat it since the main kernel already reads x exactly once in f32.
    xp = x.reshape(B, C, P, H // P, P, W // P).mean(axis=(3, 5)).reshape(B, C, PP)
    xp = xp.astype(jnp.bfloat16)                     # tiny (C x PP)

    # Channel-major, no host-side dtype sweep: x stays f32 and is cast per-tile
    # inside the kernel.  Reshape of contiguous NCHW is free.
    x_cm = x.reshape(B, C, HW)

    wq, bq, wk, bk = params                          # (K,C) bf16, (K,1) f32, x2

    out_itemsize = jnp.dtype(out_dtype).itemsize
    TQ = _choose_tile_hw(HW, C, K, B, out_itemsize=out_itemsize)
    n_tiles = pl.cdiv(HW, TQ)                        # last tile may be ragged (padded block)
    grid = (B, n_tiles)

    # Advisory cost for XLA's scheduler (mem-bound custom call).
    flops = 2 * B * (C * K * HW + C * K * PP + 2 * K * PP * HW)
    bytes_accessed = (B * C * HW * 4 + B * C * PP * 2 + 2 * K * C * 2 + 2 * K * 4
                      + B * K * HW * out_itemsize)
    cost = pl.CostEstimate(flops=flops, transcendentals=B * PP * HW,
                           bytes_accessed=bytes_accessed)

    # Explicit scoped-VMEM limit: double-buffered blocks + intermediates + slack.
    vmem_bytes = (2 * C * TQ * 4 + 2 * K * TQ * out_itemsize
                  + 2 * (C * PP * 2 + 2 * K * C * 2 + 2 * K * 4)
                  + 4 * PP * TQ * 4 + (1 << 20))
    vmem_limit = int(min(max(vmem_bytes, 32 * 1024 * 1024), 64 * 1024 * 1024))

    out_cm = pl.pallas_call(
        pam_kernel,
        out_shape=jax.ShapeDtypeStruct((B, K, HW), out_dtype),
        grid_spec=pltpu.PrefetchScalarGridSpec(
            num_scalar_prefetch=0,
            grid=grid,
            in_specs=[
                pl.BlockSpec((None, C, TQ), lambda b, t: (b, 0, t)),   # x tile (f32)
                pl.BlockSpec((None, C, PP), lambda b, t: (b, 0, 0)),   # pooled x (bf16)
                pl.BlockSpec((K, C), lambda b, t: (0, 0)),             # wq (BN folded)
                pl.BlockSpec((K, 1), lambda b, t: (0, 0)),             # bq
                pl.BlockSpec((K, C), lambda b, t: (0, 0)),             # wk (BN folded)
                pl.BlockSpec((K, 1), lambda b, t: (0, 0)),             # bk
            ],
            out_specs=pl.BlockSpec((None, K, TQ), lambda b, t: (b, 0, t)),
        ),
        compiler_params=pltpu.CompilerParams(
            dimension_semantics=("parallel", "parallel"),
            vmem_limit_bytes=vmem_limit),
        cost_estimate=cost,
    )(x_cm, xp, wq, bq, wk, bk)

    # (B, K, HW) is already NCHW-flat — just unflatten the spatial axis.
    return out_cm.reshape(B, K, H, W)


def make_params(key, in_dim, key_dim, eps=1e-5):
    """Deterministic conv + BatchNorm (inference mode) params, BN folded into the
    1x1 conv.  Weights channel-major (K, C) bf16; biases as (K, 1) f32 columns."""
    ks = jax.random.split(key, 12)

    def branch(k0, k1, k2, k3, k4, k5):
        w = jax.random.normal(k0, (key_dim, in_dim), jnp.float32) * 0.2
        b = jax.random.normal(k1, (key_dim,), jnp.float32) * 0.1
        gamma = 1.0 + 0.1 * jax.random.normal(k2, (key_dim,), jnp.float32)
        beta = 0.1 * jax.random.normal(k3, (key_dim,), jnp.float32)
        mean = 0.1 * jax.random.normal(k4, (key_dim,), jnp.float32)
        var = jnp.abs(0.1 * jax.random.normal(k5, (key_dim,), jnp.float32)) + 1.0
        scale = gamma / jnp.sqrt(var + eps)
        w_eff = (w * scale[:, None]).astype(jnp.bfloat16)          # (K, C) bf16
        b_eff = ((b - mean) * scale + beta)[:, None]               # (K, 1) f32
        return w_eff, b_eff

    wq, bq = branch(*ks[0:6])
    wk, bk = branch(*ks[6:12])
    return wq, bq, wk, bk


def pam_reference(x, params, key_dim, pool_size):
    """Pure-JAX reference mirroring the PyTorch forward (BN eval mode) with the
    same bf16-operand / f32-accumulation numerics as the kernel."""
    B, C, H, W = x.shape
    P = pool_size
    HW, PP = H * W, P * P
    wq, bq, wk, bk = params
    xp = (x.reshape(B, C, P, H // P, P, W // P).mean(axis=(3, 5))
          .reshape(B, C, PP).astype(jnp.bfloat16))
    x_cm = x.reshape(B, C, HW).astype(jnp.bfloat16)
    qT = jax.nn.relu(jnp.einsum("kc,bcn->bkn", wq, x_cm,
                                preferred_element_type=jnp.float32) + bq[None])       # (B, K, HW)
    kT = jax.nn.relu(jnp.einsum("kc,bcp->bkp", wk, xp,
                                preferred_element_type=jnp.float32) + bk[None])       # (B, K, PP)
    energy = jnp.einsum("bkn,bkp->bnp", qT.astype(jnp.bfloat16), kT.astype(jnp.bfloat16),
                        preferred_element_type=jnp.float32)                           # (B, HW, PP)
    attn = jax.nn.softmax(energy, axis=-1)
    out = jnp.einsum("bkp,bnp->bkn", kT.astype(jnp.bfloat16), attn.astype(jnp.bfloat16),
                     preferred_element_type=jnp.float32) + qT                         # (B, K, HW)
    return out.reshape(B, key_dim, H, W)


if __name__ == "__main__":
    KEY_DIM, POOL = 8, 4

    # Test 1: small shape, tile spans the full token axis.
    B, C, H, W = 2, 4, 16, 16
    kx, kp = jax.random.split(jax.random.PRNGKey(0))
    x = jax.random.normal(kx, (B, C, H, W), jnp.float32)
    params = make_params(kp, C, KEY_DIM)
    out = jax.block_until_ready(pam_forward(x, params, KEY_DIM, POOL))
    ref = pam_reference(x, params, KEY_DIM, POOL)
    assert out.shape == (B, KEY_DIM, H, W)
    assert jnp.allclose(out.astype(jnp.float32), ref, atol=6e-2, rtol=6e-2), \
        "mismatch vs reference (test 1)"

    # Test 2: ragged token tiling (HW=576 is not a multiple of the 128-lane tile).
    B2, C2, H2, W2 = 2, 8, 24, 24
    kx2, kp2 = jax.random.split(jax.random.PRNGKey(1))
    x2 = jax.random.normal(kx2, (B2, C2, H2, W2), jnp.float32)
    params2 = make_params(kp2, C2, KEY_DIM)
    out2 = jax.block_until_ready(pam_forward(x2, params2, KEY_DIM, POOL))
    ref2 = pam_reference(x2, params2, KEY_DIM, POOL)
    assert out2.shape == (B2, KEY_DIM, H2, W2)
    assert jnp.allclose(out2.astype(jnp.float32), ref2, atol=6e-2, rtol=6e-2), \
        "mismatch vs reference (test 2, ragged tiles)"

    print("KERNEL_OK")
</pallas_src>

<mosaic_0001>
module attributes {stable_mosaic.version = 11 : i64} {
  func.func @pam_kernel(%arg0: i32, %arg1: i32, %arg2: memref<1x4x256xf32, #tpu.memory_space<vmem>>, %arg3: memref<1x4x16xbf16, #tpu.memory_space<vmem>>, %arg4: memref<8x4xbf16, #tpu.memory_space<vmem>>, %arg5: memref<8x1xf32, #tpu.memory_space<vmem>>, %arg6: memref<8x4xbf16, #tpu.memory_space<vmem>>, %arg7: memref<8x1xf32, #tpu.memory_space<vmem>>, %arg8: memref<1x8x256xbf16, #tpu.memory_space<vmem>>) attributes {dimension_semantics = [#tpu.dimension_semantics<parallel>, #tpu.dimension_semantics<parallel>], iteration_bounds = array<i64: 2, 1>, scalar_prefetch = 0 : i64, scratch_operands = 0 : i64, tpu.core_type = #tpu.core_type<tc>, window_params = [{transform_indices = @transform_0, window_bounds = array<i64: 1, 4, 256>}, {transform_indices = @transform_1, window_bounds = array<i64: 1, 4, 16>}, {pipeline_mode = #tpu.pipeline_mode<synchronous>, transform_indices = @transform_2, window_bounds = array<i64: 8, 4>}, {pipeline_mode = #tpu.pipeline_mode<synchronous>, transform_indices = @transform_3, window_bounds = array<i64: 8, 1>}, {pipeline_mode = #tpu.pipeline_mode<synchronous>, transform_indices = @transform_4, window_bounds = array<i64: 8, 4>}, {pipeline_mode = #tpu.pipeline_mode<synchronous>, transform_indices = @transform_5, window_bounds = array<i64: 8, 1>}, {transform_indices = @transform_6, window_bounds = array<i64: 1, 8, 256>}]} {
    %c0 = arith.constant 0 : index
    %c0_0 = arith.constant 0 : index
    %c0_1 = arith.constant 0 : index
    %0 = vector.load %arg2[%c0, %c0_0, %c0_1] : memref<1x4x256xf32, #tpu.memory_space<vmem>>, vector<1x4x256xf32>
    %1 = vector.shape_cast %0 : vector<1x4x256xf32> to vector<4x256xf32>
    %2 = arith.truncf %1 : vector<4x256xf32> to vector<4x256xbf16>
    %c0_2 = arith.constant 0 : index
    %c0_3 = arith.constant 0 : index
    %c0_4 = arith.constant 0 : index
    %3 = vector.load %arg3[%c0_2, %c0_3, %c0_4] : memref<1x4x16xbf16, #tpu.memory_space<vmem>>, vector<1x4x16xbf16>
    %4 = vector.shape_cast %3 : vector<1x4x16xbf16> to vector<4x16xbf16>
    %c0_5 = arith.constant 0 : index
    %c0_6 = arith.constant 0 : index
    %5 = vector.load %arg4[%c0_5, %c0_6] : memref<8x4xbf16, #tpu.memory_space<vmem>>, vector<8x4xbf16>
    %c0_7 = arith.constant 0 : index
    %c0_8 = arith.constant 0 : index
    %6 = vector.load %arg5[%c0_7, %c0_8] : memref<8x1xf32, #tpu.memory_space<vmem>>, vector<8x1xf32>
    %c0_9 = arith.constant 0 : index
    %c0_10 = arith.constant 0 : index
    %7 = vector.load %arg6[%c0_9, %c0_10] : memref<8x4xbf16, #tpu.memory_space<vmem>>, vector<8x4xbf16>
    %c0_11 = arith.constant 0 : index
    %c0_12 = arith.constant 0 : index
    %8 = vector.load %arg7[%c0_11, %c0_12] : memref<8x1xf32, #tpu.memory_space<vmem>>, vector<8x1xf32>
    %cst = arith.constant dense<0.000000e+00> : vector<8x256xf32>
    %9 = tpu.matmul %5, %2, %cst {dimension_numbers = #tpu.dot_dimension_numbers<[1], [0], [0], [1], [0, 0, 1, 1], [], []>} : vector<8x4xbf16>, vector<4x256xbf16>, vector<8x256xf32> -> vector<8x256xf32>
    %10 = vector.broadcast %6 : vector<8x1xf32> to vector<8x256xf32>
    %11 = arith.addf %9, %10 : vector<8x256xf32>
    %cst_13 = arith.constant 0.000000e+00 : f32
    %12 = vector.broadcast %cst_13 : f32 to vector<8x256xf32>
    %13 = arith.maximumf %11, %12 : vector<8x256xf32>
    %cst_14 = arith.constant dense<0.000000e+00> : vector<8x16xf32>
    %14 = tpu.matmul %7, %4, %cst_14 {dimension_numbers = #tpu.dot_dimension_numbers<[1], [0], [0], [1], [0, 0, 1, 1], [], []>} : vector<8x4xbf16>, vector<4x16xbf16>, vector<8x16xf32> -> vector<8x16xf32>
    %15 = vector.broadcast %8 : vector<8x1xf32> to vector<8x16xf32>
    %16 = arith.addf %14, %15 : vector<8x16xf32>
    %cst_15 = arith.constant 0.000000e+00 : f32
    %17 = vector.broadcast %cst_15 : f32 to vector<8x16xf32>
    %18 = arith.maximumf %16, %17 : vector<8x16xf32>
    %19 = arith.truncf %18 : vector<8x16xf32> to vector<8x16xbf16>
    %20 = arith.truncf %13 : vector<8x256xf32> to vector<8x256xbf16>
    %cst_16 = arith.constant dense<0.000000e+00> : vector<16x256xf32>
    %21 = tpu.matmul %19, %20, %cst_16 {dimension_numbers = #tpu.dot_dimension_numbers<[0], [0], [1], [1], [0, 1, 1, 1], [], []>} : vector<8x16xbf16>, vector<8x256xbf16>, vector<16x256xf32> -> vector<16x256xf32>
    %cst_17 = arith.constant dense<0xFF800000> : vector<256xf32>
    %22 = vector.multi_reduction <maximumf>, %21, %cst_17 [0] : vector<16x256xf32> to vector<256xf32>
    %23 = vector.shape_cast %22 : vector<256xf32> to vector<1x256xf32>
    %24 = vector.broadcast %23 : vector<1x256xf32> to vector<16x256xf32>
    %25 = arith.subf %21, %24 : vector<16x256xf32>
    %26 = math.exp %25 : vector<16x256xf32>
    %cst_18 = arith.constant dense<0.000000e+00> : vector<256xf32>
    %27 = vector.multi_reduction <add>, %26, %cst_18 [0] : vector<16x256xf32> to vector<256xf32>
    %28 = vector.shape_cast %27 : vector<256xf32> to vector<1x256xf32>
    %29 = tpu.reciprocal %28 {approx = true} : vector<1x256xf32> -> vector<1x256xf32>
    %30 = arith.truncf %26 : vector<16x256xf32> to vector<16x256xbf16>
    %cst_19 = arith.constant dense<0.000000e+00> : vector<8x256xf32>
    %31 = tpu.matmul %19, %30, %cst_19 {dimension_numbers = #tpu.dot_dimension_numbers<[1], [0], [0], [1], [0, 0, 1, 1], [], []>} : vector<8x16xbf16>, vector<16x256xbf16>, vector<8x256xf32> -> vector<8x256xf32>
    %32 = vector.broadcast %29 : vector<1x256xf32> to vector<8x256xf32>
    %33 = arith.mulf %31, %32 : vector<8x256xf32>
    %34 = arith.addf %33, %13 : vector<8x256xf32>
    %35 = arith.truncf %34 : vector<8x256xf32> to vector<8x256xbf16>
    %c0_20 = arith.constant 0 : index
    %c0_21 = arith.constant 0 : index
    %c0_22 = arith.constant 0 : index
    %36 = vector.load %arg8[%c0_20, %c0_21, %c0_22] : memref<1x8x256xbf16, #tpu.memory_space<vmem>>, vector<1x8x256xbf16>
    %37 = vector.shape_cast %36 : vector<1x8x256xbf16> to vector<8x256xbf16>
    %38 = vector.shape_cast %35 : vector<8x256xbf16> to vector<1x8x256xbf16>
    tpu.vector_store %arg8[%c0_20, %c0_21, %c0_22], %38 {strides = array<i32>} : memref<1x8x256xbf16, #tpu.memory_space<vmem>>, vector<1x8x256xbf16>,
    return
  }
  func.func @transform_0(%arg0: i32, %arg1: i32) -> (i32, i32, i32) {
    %c0_i32 = arith.constant 0 : i32
    %c0_i32_0 = arith.constant 0 : i32
    return %arg0, %c0_i32, %arg1 : i32, i32, i32
  }
  func.func @transform_1(%arg0: i32, %arg1: i32) -> (i32, i32, i32) {
    %c0_i32 = arith.constant 0 : i32
    %c0_i32_0 = arith.constant 0 : i32
    %c0_i32_1 = arith.constant 0 : i32
    return %arg0, %c0_i32, %c0_i32_0 : i32, i32, i32
  }
  func.func @transform_2(%arg0: i32, %arg1: i32) -> (i32, i32) {
    %c0_i32 = arith.constant 0 : i32
    %c0_i32_0 = arith.constant 0 : i32
    %c0_i32_1 = arith.constant 0 : i32
    return %c0_i32, %c0_i32_0 : i32, i32
  }
  func.func @transform_3(%arg0: i32, %arg1: i32) -> (i32, i32) {
    %c0_i32 = arith.constant 0 : i32
    %c0_i32_0 = arith.constant 0 : i32
    %c0_i32_1 = arith.constant 0 : i32
    return %c0_i32, %c0_i32_0 : i32, i32
  }
  func.func @transform_4(%arg0: i32, %arg1: i32) -> (i32, i32) {
    %c0_i32 = arith.constant 0 : i32
    %c0_i32_0 = arith.constant 0 : i32
    %c0_i32_1 = arith.constant 0 : i32
    return %c0_i32, %c0_i32_0 : i32, i32
  }
  func.func @transform_5(%arg0: i32, %arg1: i32) -> (i32, i32) {
    %c0_i32 = arith.constant 0 : i32
    %c0_i32_0 = arith.constant 0 : i32
    %c0_i32_1 = arith.constant 0 : i32
    return %c0_i32, %c0_i32_0 : i32, i32
  }
  func.func @transform_6(%arg0: i32, %arg1: i32) -> (i32, i32, i32) {
    %c0_i32 = arith.constant 0 : i32
    %c0_i32_0 = arith.constant 0 : i32
    return %arg0, %c0_i32, %arg1 : i32, i32, i32
  }
}

</mosaic_0001>

<llo_original>
// kernel: tpu_custom_call.1
$region0: #{tpu_custom_call.1}
  #allocation0 [shape = 'u32[]', space=smem, size = 0x4, offset = 0x4, fixed_abs, tag = 'smem constant byte address 0x4 - core index']
  #allocation1 [shape = 'u32[144,128]{1,0:T(1,128)}', space=vmem, size = 0x12000, scoped, tag = 'internal scratch']
  %s0 = inlined_call_operand.vmem [shape: f32[2,4,256], index: 0, kind: input, shape index: {}]
  %s1 = inlined_call_operand.vmem [shape: bf16[2,4,16], index: 1, kind: input, shape index: {}]
  %s2 = inlined_call_operand.vmem [shape: bf16[8,4], index: 2, kind: input, shape index: {}]
  %s3 = inlined_call_operand.vmem [shape: f32[8,1], index: 3, kind: input, shape index: {}]
  %s4 = inlined_call_operand.vmem [shape: bf16[8,4], index: 4, kind: input, shape index: {}]
  %s5 = inlined_call_operand.vmem [shape: f32[8,1], index: 5, kind: input, shape index: {}]
  %s6 = inlined_call_operand.hbm [shape: bf16[2,8,256], index: 6, kind: output, shape index: {}]
  %s7 = sld [smem:[#allocation0]]
  $region57: #{tpu_custom_call.1} parent=0
    _
  %s9 = ssub.s32 1, %s7
  %s10 = scalar_select 0, %s9, %s7
  $region1: #{tpu_custom_call.1} parent=0
    #allocation2 [shape = 'u8[8192]{0}', space=vmem, size = 0x2000, scoped, tag = 'output window, operand 0']
    #allocation3 [shape = 's32[2]{0}', space=sflag, size = 0x8, scoped, tag = 'scoped memory for tpu_custom_call.1']
    %11 = vsyncpa [#allocation3], 0
    %s12 = scalar_lea.sflag [#allocation3], 1
    %13 = vsyncpa %s12, 0
    loop: start=0, step=1, limit=4
    $region2: #{tpu_custom_call.1} parent=1 // loop_pre_header
      _
    $region3: #{tpu_custom_call.1} parent=1 // loop_header
      %s15 = sphi 0, %s19
      %p16 = scmp.ge.s32.totalorder %s15, 4
      %s22 = sphi 0, %s34
      %s23 = sphi 0, %s30
      %s24 = sphi 0, %s22
      %s25 = sphi 0, %s23
      %s26 = sphi 0, %s24
      %s27 = sphi 0, %s25
      %s39 = sphi 0, %s41
      %s42 = sphi 0, %s39
      %s43 = sphi 0, %s42
      %s59 = sphi 0, %s43
      %s65 = sphi 0, %s67
      %s68 = sphi 0, %s65
      %s69 = sphi 0, %s68
      %s85 = sphi 0, %s69
      %s89 = sphi 0, %s89
      %s91 = sphi 0, %s89
      %s92 = sphi 0, %s91
      %s106 = sphi 0, %s92
      %s110 = sphi 0, %s110
      %s112 = sphi 0, %s110
      %s113 = sphi 0, %s112
      %s127 = sphi 0, %s113
      %s131 = sphi 0, %s131
      %s133 = sphi 0, %s131
      %s134 = sphi 0, %s133
      %s148 = sphi 0, %s134
      %s152 = sphi 0, %s152
      %s154 = sphi 0, %s152
      %s155 = sphi 0, %s154
      %s169 = sphi 0, %s155
      %s177 = sphi 0, %s179
      %s180 = sphi 0, %s177
      %s181 = sphi 0, %s180
      %s197 = sphi 0, %s181
    $region4: #{tpu_custom_call.1} parent=1 // loop_header_branch
      %18 = sbr.rel (%p16) target = $region8
    $region5: #{tpu_custom_call.1} parent=1 // loop_body
      %s20 = ssub.s32 %s15, 1
      %s21 = ssub.s32 %s15, 2
      %s28 = sadd.s32 1, %s23
      %p29 = scmp.ge.s32.totalorder %s28, 1
      %s30 = scalar_select %p29, 0, %s28
      %s31 = sadd.s32 1, %s22
      %s32 = scalar_select %p29, %s31, %s22
      %p33 = scmp.ge.s32.totalorder %s32, 2
      %s34 = scalar_select %p33, 0, %s32
      %s35 = ssub.s32 %s22, %s34
      %s36 = ssub.s32 %s23, %s30
      %s37 = sor.u32 %s35, %s36
      %p38 = scmp.eq.s32.totalorder %s37, 0
      %s40 = sadd.s32 %s39, 1
      %s41 = scalar_select %p38, %s39, %s40
      %p44 = pneg %p38
      %p45 = scmp.eq.s32.totalorder %s15, 1
      %p46 = por %p44, %p45
      %p47 = scmp.ne.s32.totalorder %s39, %s42
      %p48 = scmp.eq.s32.totalorder %s15, 0
      %p49 = por %p47, %p48
      %p50 = scmp.ne.s32.totalorder %s39, %s42
      %p51 = scmp.eq.s32.totalorder %s20, 1
      %p52 = por %p50, %p51
      %p53 = scmp.ne.s32.totalorder %s42, %s43
      %p54 = scmp.eq.s32.totalorder %s20, 0
      %p55 = por %p53, %p54
      %p56 = scmp.ne.s32.totalorder %s42, %s43
      %p57 = scmp.eq.s32.totalorder %s21, 1
      %p58 = por %p56, %p57
      %p60 = scmp.ne.s32.totalorder %s43, %s59
      %p61 = scmp.eq.s32.totalorder %s21, 0
      %p62 = por %p60, %p61
      %s63 = ssub.s32 %s22, %s34
      %p64 = scmp.eq.s32.totalorder %s63, 0
      %s66 = sadd.s32 %s65, 1
      %s67 = scalar_select %p64, %s65, %s66
      %p70 = pneg %p64
      %p71 = scmp.eq.s32.totalorder %s15, 1
      %p72 = por %p70, %p71
      %p73 = scmp.ne.s32.totalorder %s65, %s68
      %p74 = scmp.eq.s32.totalorder %s15, 0
      %p75 = por %p73, %p74
      %p76 = scmp.ne.s32.totalorder %s65, %s68
      %p77 = scmp.eq.s32.totalorder %s20, 1
      %p78 = por %p76, %p77
      %p79 = scmp.ne.s32.totalorder %s68, %s69
      %p80 = scmp.eq.s32.totalorder %s20, 0
      %p81 = por %p79, %p80
      %p82 = scmp.ne.s32.totalorder %s68, %s69
      %p83 = scmp.eq.s32.totalorder %s21, 1
      %p84 = por %p82, %p83
      %p86 = scmp.ne.s32.totalorder %s69, %s85
      %p87 = scmp.eq.s32.totalorder %s21, 0
      %p88 = por %p86, %p87
      %s90 = sadd.s32 %s89, 1
      %p93 = scmp.eq.s32.totalorder %s15, 1
      %p94 = scmp.ne.s32.totalorder %s89, %s91
      %p95 = scmp.eq.s32.totalorder %s15, 0
      %p96 = por %p94, %p95
      %p97 = scmp.ne.s32.totalorder %s89, %s91
      %p98 = scmp.eq.s32.totalorder %s20, 1
      %p99 = por %p97, %p98
      %p100 = scmp.ne.s32.totalorder %s91, %s92
      %p101 = scmp.eq.s32.totalorder %s20, 0
      %p102 = por %p100, %p101
      %p103 = scmp.ne.s32.totalorder %s91, %s92
      %p104 = scmp.eq.s32.totalorder %s21, 1
      %p105 = por %p103, %p104
      %p107 = scmp.ne.s32.totalorder %s92, %s106
      %p108 = scmp.eq.s32.totalorder %s21, 0
      %p109 = por %p107, %p108
      %s111 = sadd.s32 %s110, 1
      %p114 = scmp.eq.s32.totalorder %s15, 1
      %p115 = scmp.ne.s32.totalorder %s110, %s112
      %p116 = scmp.eq.s32.totalorder %s15, 0
      %p117 = por %p115, %p116
      %p118 = scmp.ne.s32.totalorder %s110, %s112
      %p119 = scmp.eq.s32.totalorder %s20, 1
      %p120 = por %p118, %p119
      %p121 = scmp.ne.s32.totalorder %s112, %s113
      %p122 = scmp.eq.s32.totalorder %s20, 0
      %p123 = por %p121, %p122
      %p124 = scmp.ne.s32.totalorder %s112, %s113
      %p125 = scmp.eq.s32.totalorder %s21, 1
      %p126 = por %p124, %p125
      %p128 = scmp.ne.s32.totalorder %s113, %s127
      %p129 = scmp.eq.s32.totalorder %s21, 0
      %p130 = por %p128, %p129
      %s132 = sadd.s32 %s131, 1
      %p135 = scmp.eq.s32.totalorder %s15, 1
      %p136 = scmp.ne.s32.totalorder %s131, %s133
      %p137 = scmp.eq.s32.totalorder %s15, 0
      %p138 = por %p136, %p137
      %p139 = scmp.ne.s32.totalorder %s131, %s133
      %p140 = scmp.eq.s32.totalorder %s20, 1
      %p141 = por %p139, %p140
      %p142 = scmp.ne.s32.totalorder %s133, %s134
      %p143 = scmp.eq.s32.totalorder %s20, 0
      %p144 = por %p142, %p143
      %p145 = scmp.ne.s32.totalorder %s133, %s134
      %p146 = scmp.eq.s32.totalorder %s21, 1
      %p147 = por %p145, %p146
      %p149 = scmp.ne.s32.totalorder %s134, %s148
      %p150 = scmp.eq.s32.totalorder %s21, 0
      %p151 = por %p149, %p150
      %s153 = sadd.s32 %s152, 1
      %p156 = scmp.eq.s32.totalorder %s15, 1
      %p157 = scmp.ne.s32.totalorder %s152, %s154
      %p158 = scmp.eq.s32.totalorder %s15, 0
      %p159 = por %p157, %p158
      %p160 = scmp.ne.s32.totalorder %s152, %s154
      %p161 = scmp.eq.s32.totalorder %s20, 1
      %p162 = por %p160, %p161
      %p163 = scmp.ne.s32.totalorder %s154, %s155
      %p164 = scmp.eq.s32.totalorder %s20, 0
      %p165 = por %p163, %p164
      %p166 = scmp.ne.s32.totalorder %s154, %s155
      %p167 = scmp.eq.s32.totalorder %s21, 1
      %p168 = por %p166, %p167
      %p170 = scmp.ne.s32.totalorder %s155, %s169
      %p171 = scmp.eq.s32.totalorder %s21, 0
      %p172 = por %p170, %p171
      %s173 = ssub.s32 %s22, %s34
      %s174 = ssub.s32 %s23, %s30
      %s175 = sor.u32 %s173, %s174
      %p176 = scmp.eq.s32.totalorder %s175, 0
      %s178 = sadd.s32 %s177, 1
      %s179 = scalar_select %p176, %s177, %s178
      %p182 = pneg %p176
      %p183 = scmp.eq.s32.totalorder %s15, 1
      %p184 = por %p182, %p183
      %p185 = scmp.ne.s32.totalorder %s177, %s180
      %p186 = scmp.eq.s32.totalorder %s15, 0
      %p187 = por %p185, %p186
      %p188 = scmp.ne.s32.totalorder %s177, %s180
      %p189 = scmp.eq.s32.totalorder %s20, 1
      %p190 = por %p188, %p189
      %p191 = scmp.ne.s32.totalorder %s180, %s181
      %p192 = scmp.eq.s32.totalorder %s20, 0
      %p193 = por %p191, %p192
      %p194 = scmp.ne.s32.totalorder %s180, %s181
      %p195 = scmp.eq.s32.totalorder %s21, 1
      %p196 = por %p194, %p195
      %p198 = scmp.ne.s32.totalorder %s181, %s197
      %p199 = scmp.eq.s32.totalorder %s21, 0
      %p200 = por %p198, %p199
      %p201 = scmp.le.s32.totalorder 1, %s15
      %p202 = scmp.lt.s32.totalorder %s15, 3
      %p203 = pnand %p201, %p202
      %p204 = pneg %p203
      // Predicated region
      $region9: #{tpu_custom_call.1} parent=5 // pred_check
        _
      $region10: #{tpu_custom_call.1} parent=5 // pred_check_branch
        %206 = sbr.rel (%p203) target = $region12
      $region11: #{tpu_custom_call.1} parent=5 // pred_region
        %s207 = ssub.s32 %s15, 1
        // Predicated region
        $region13: #{tpu_custom_call.1} parent=11 // pred_check
          %p208 = pneg %p102
        $region14: #{tpu_custom_call.1} parent=11 // pred_check_branch
          %210 = sbr.rel (%p208) target = $region16
        $region15: #{tpu_custom_call.1} parent=11 // pred_region
          _
        $region16: #{tpu_custom_call.1} parent=11 // pred_fallthru
          _
        // Predicated region
        $region17: #{tpu_custom_call.1} parent=11 // pred_check
          %p211 = pneg %p123
        $region18: #{tpu_custom_call.1} parent=11 // pred_check_branch
          %213 = sbr.rel (%p211) target = $region20
        $region19: #{tpu_custom_call.1} parent=11 // pred_region
          _
        $region20: #{tpu_custom_call.1} parent=11 // pred_fallthru
          _
        // Predicated region
        $region21: #{tpu_custom_call.1} parent=11 // pred_check
          %p214 = pneg %p144
        $region22: #{tpu_custom_call.1} parent=11 // pred_check_branch
          %216 = sbr.rel (%p214) target = $region24
        $region23: #{tpu_custom_call.1} parent=11 // pred_region
          _
        $region24: #{tpu_custom_call.1} parent=11 // pred_fallthru
          _
        // Predicated region
        $region25: #{tpu_custom_call.1} parent=11 // pred_check
          %p217 = pneg %p165
        $region26: #{tpu_custom_call.1} parent=11 // pred_check_branch
          %219 = sbr.rel (%p217) target = $region28
        $region27: #{tpu_custom_call.1} parent=11 // pred_region
          _
        $region28: #{tpu_custom_call.1} parent=11 // pred_fallthru
          _
      $region12: #{tpu_custom_call.1} parent=5 // pred_fallthru
        _
      %p220 = scmp.lt.s32.totalorder %s15, 2
      // Predicated region
      $region29: #{tpu_custom_call.1} parent=5 // pred_check
        %p221 = pneg %p220
      $region30: #{tpu_custom_call.1} parent=5 // pred_check_branch
        %223 = sbr.rel (%p221) target = $region32
      $region31: #{tpu_custom_call.1} parent=5 // pred_region
        // Predicated region
        $region33: #{tpu_custom_call.1} parent=31 // pred_check
          %p224 = pneg %p49
        $region34: #{tpu_custom_call.1} parent=31 // pred_check_branch
          %226 = sbr.rel (%p224) target = $region36
        $region35: #{tpu_custom_call.1} parent=31 // pred_region
          %s227 = smul.u32 2, %s23
          %p228 = scmp.lt.s32.totalorder %s22, 1
          %s229 = scalar_select %p228, %s22, 1
          %p230 = scmp.lt.s32.totalorder %s227, 1
          %s231 = scalar_select %p230, %s227, 1
          %s232 = smul.addr %s229, 2
          %s233 = sadd.s32 %s231, %s232
          %s234 = smul.addr %s233, 4
          %s235 = scalar_lea.vmem %s0, %s234
          %s236 = smul.u32 2, %s23
        $region36: #{tpu_custom_call.1} parent=31 // pred_fallthru
          _
        // Predicated region
        $region37: #{tpu_custom_call.1} parent=31 // pred_check
          %p237 = pneg %p75
        $region38: #{tpu_custom_call.1} parent=31 // pred_check_branch
          %239 = sbr.rel (%p237) target = $region40
        $region39: #{tpu_custom_call.1} parent=31 // pred_region
          %p240 = scmp.lt.s32.totalorder %s22, 1
          %s241 = scalar_select %p240, %s22, 1
          %s242 = smul.addr %s241, 2
          %s243 = scalar_lea.vmem %s1, %s242
        $region40: #{tpu_custom_call.1} parent=31 // pred_fallthru
          _
      $region32: #{tpu_custom_call.1} parent=5 // pred_fallthru
        _
      %p244 = scmp.le.s32.totalorder 1, %s15
      %p245 = scmp.lt.s32.totalorder %s15, 3
      %p246 = pnand %p244, %p245
      %p247 = pneg %p246
      // Predicated region
      $region41: #{tpu_custom_call.1} parent=5 // pred_check
        _
      $region42: #{tpu_custom_call.1} parent=5 // pred_check_branch
        %249 = sbr.rel (%p246) target = $region44
      $region43: #{tpu_custom_call.1} parent=5 // pred_region
        %s250 = ssub.s32 %s15, 1
        %s251 = smul.u32 2, %s25
        %p252 = scmp.lt.s32.totalorder %s24, 1
        %s253 = scalar_select %p252, %s24, 1
        %p254 = scmp.lt.s32.totalorder %s251, 1
        %s255 = scalar_select %p254, %s251, 1
        %s256 = smul.addr %s253, 2
        %s257 = sadd.s32 %s255, %s256
        %s258 = smul.addr %s257, 4
        %s259 = scalar_lea.vmem %s0, %s258
        %p260 = pneg %p55
        %p261 = pneg %p52
        %p262 = scmp.lt.s32.totalorder %s24, 1
        %s263 = scalar_select %p262, %s24, 1
        %s264 = smul.addr %s263, 2
        %s265 = scalar_lea.vmem %s1, %s264
        %p266 = pneg %p81
        %p267 = pneg %p78
        %p268 = pneg %p102
        %p269 = pneg %p99
        %p270 = pneg %p123
        %p271 = pneg %p120
        %p272 = pneg %p144
        %p273 = pneg %p141
        %p274 = pneg %p165
        %p275 = pneg %p162
        %p276 = pneg %p193
        %p277 = pneg %p190
        %s278 = sand.u32 %s180, 1
        %s279 = scalar_lea.sflag [#allocation3], %s278
        %s280 = sand.u32 %s180, 1
        %s281 = smul.addr %s280, 8
        %s282 = scalar_lea.vmem [#allocation2], %s281
        %s283 = smul.u32 2, %s25
        %p284 = scmp.lt.s32.totalorder %s24, 1
        %s285 = scalar_select %p284, %s24, 1
        %p286 = scmp.lt.s32.totalorder %s283, 1
        %s287 = scalar_select %p286, %s283, 1
        %s288 = smul.addr %s285, 2
        %s289 = sadd.s32 %s287, %s288
        %s290 = smul.addr %s289, 4
        %s291 = scalar_lea.vmem %s0, %s290
        %s292 = smul.u32 2, %s25
        %p293 = scmp.lt.s32.totalorder %s24, 1
        %s294 = scalar_select %p293, %s24, 1
        %s295 = smul.addr %s294, 2
        %s296 = scalar_lea.vmem %s1, %s295
        %s297 = smul.u32 2, %s25
        %v299 = vld [vmem:[%s291] sm:$0xff]
        %v301 = vcombine.high %v299, %v299
        %v303 = vpack.c.bf16 %v299, %v299
        %v304 = vpack.c.bf16 %v301, %v301
        %v305 = vld [vmem:[%s296] sm:$0x3]
        %v306 = vld [vmem:[%s2] sm:$0xf]
        %v307 = vld [vmem:[%s3] sm:$0xff]
        %v308 = vld [vmem:[%s4] sm:$0xf]
        %v309 = vld [vmem:[%s5] sm:$0xff]
        %311 = vset.pattern.permute.xlu0 0
        %312 = vperm.xlu0 %311, %v307
        %v313 = vpop.permute.xlu0 %312
        %vm315 = vcmask 31744
        %v317 = vsel %vm315, %v306, 0
        %vm319 = vcmask 1041408
        %v321 = vsel %vm319, %v303, 0
        %v324 = vsel %vm319, %v304, 0
        %326 = vmatprep.subr.bf16.mxu0 %v324
        %327 = vmatpush1.bf16.msra.mxu0 %v321
        %328 = vmatprep.subr.bf16.mxu0 0
        %329 = vmatpush1.bf16.msra.mxu0 0
        %330 = vmatprep.subr.bf16.mxu0 0
        %331 = vmatpush1.bf16.msra.mxu0 0
        %332 = vmatprep.subr.bf16.mxu0 0
        %333 = vmatpush1.bf16.msra.mxu0 0
        %334 = vmatprep.subr.bf16.mxu0 0
        %335 = vmatpush1.bf16.msra.mxu0 0
        %336 = vmatprep.subr.bf16.mxu0 0
        %337 = vmatpush1.bf16.msra.mxu0 0
        %338 = vmatprep.subr.bf16.mxu0 0
        %339 = vmatpush1.bf16.msra.mxu0 0
        %340 = vmatprep.subr.bf16.mxu0 0
        %341 = vmatpush1.bf16.msra.mxu0 0
        %342 = vmatprep.subr.bf16.mxu0 0
        %343 = vmatpush1.bf16.msra.mxu0 0
        %344 = vmatprep.subr.bf16.mxu0 0
        %345 = vmatpush1.bf16.msra.mxu0 0
        %346 = vmatprep.subr.bf16.mxu0 0
        %347 = vmatpush1.bf16.msra.mxu0 0
        %348 = vmatprep.subr.bf16.mxu0 0
        %349 = vmatpush1.bf16.msra.mxu0 0
        %350 = vmatprep.subr.bf16.mxu0 0
        %351 = vmatpush1.bf16.msra.mxu0 0
        %352 = vmatprep.subr.bf16.mxu0 0
        %353 = vmatpush1.bf16.msra.mxu0 0
        %354 = vmatprep.subr.bf16.mxu0 0
        %355 = vmatpush1.bf16.msra.mxu0 0
        %356 = vmatprep.subr.bf16.mxu0 0
        %357 = vmatpush1.bf16.msra.mxu0 0
        %358 = vmatprep.mubr.bf16.mxu0 0
        %359 = vmatmul.mubr.bf16.gmra.mrb[0].mxu0 %v317
        %v360 = vpop.f32.mrb[0].mxu0
        %v361 = vadd.f32 %v313, %v360
        %v362 = vpop.f32.mrb[0].mxu0
        %v363 = vadd.f32 %v313, %v362
        %v364 = vpop.f32.mrb[0].mxu0
        %v365 = vpop.f32.mrb[0].mxu0
        %366 = vdwg.mxu0
        %v367 = vmax.f32 %v361, 0.0
        %v368 = vmax.f32 %v363, 0.0
        %370 = vset.pattern.permute.xlu0 0
        %371 = vperm.xlu0 %370, %v309
        %v372 = vpop.permute.xlu0 %371
        %v375 = vsel %vm315, %v308, 0
        %v378 = vsel %vm319, %v305, 0
        %380 = vmatprep.subr.bf16.mxu0 0
        %381 = vmatpush1.bf16.msra.mxu0 %v378
        %382 = vmatprep.subr.bf16.mxu0 0
        %383 = vmatpush1.bf16.msra.mxu0 0
        %384 = vmatprep.subr.bf16.mxu0 0
        %385 = vmatpush1.bf16.msra.mxu0 0
        %386 = vmatprep.subr.bf16.mxu0 0
        %387 = vmatpush1.bf16.msra.mxu0 0
        %388 = vmatprep.subr.bf16.mxu0 0
        %389 = vmatpush1.bf16.msra.mxu0 0
        %390 = vmatprep.subr.bf16.mxu0 0
        %391 = vmatpush1.bf16.msra.mxu0 0
        %392 = vmatprep.subr.bf16.mxu0 0
        %393 = vmatpush1.bf16.msra.mxu0 0
        %394 = vmatprep.subr.bf16.mxu0 0
        %395 = vmatpush1.bf16.msra.mxu0 0
        %396 = vmatprep.subr.bf16.mxu0 0
        %397 = vmatpush1.bf16.msra.mxu0 0
        %398 = vmatprep.subr.bf16.mxu0 0
        %399 = vmatpush1.bf16.msra.mxu0 0
        %400 = vmatprep.subr.bf16.mxu0 0
        %401 = vmatpush1.bf16.msra.mxu0 0
        %402 = vmatprep.subr.bf16.mxu0 0
        %403 = vmatpush1.bf16.msra.mxu0 0
        %404 = vmatprep.subr.bf16.mxu0 0
        %405 = vmatpush1.bf16.msra.mxu0 0
        %406 = vmatprep.subr.bf16.mxu0 0
        %407 = vmatpush1.bf16.msra.mxu0 0
        %408 = vmatprep.subr.bf16.mxu0 0
        %409 = vmatpush1.bf16.msra.mxu0 0
        %410 = vmatprep.subr.bf16.mxu0 0
        %411 = vmatpush1.bf16.msra.mxu0 0
        %412 = vmatprep.mubr.bf16.mxu0 0
        %413 = vmatmul.mubr.bf16.gmra.mrb[0].mxu0 %v375
        %v414 = vpop.f32.mrb[0].mxu0
        %v415 = vadd.f32 %v372, %v414
        %v416 = vpop.f32.mrb[0].mxu0
        %v417 = vpop.f32.mrb[0].mxu0
        %v418 = vpop.f32.mrb[0].mxu0
        %419 = vdwg.mxu0
        %v420 = vmax.f32 %v415, 0.0
        %v421 = vpack.c.bf16 %v420, %v420
        %v422 = vpack.c.bf16 %v367, %v367
        %v423 = vpack.c.bf16 %v368, %v368
        %424 = vxpose.xlu0.c.b16.start [1/8] %v421, 128
        %425 = vxpose.xlu0.c.b16.cont [2/8] 0, 128
        %426 = vxpose.xlu0.c.b16.cont [3/8] 0, 128
        %427 = vxpose.xlu0.c.b16.cont [4/8] 0, 128
        %428 = vxpose.xlu0.c.b16.cont [5/8] 0, 128
        %429 = vxpose.xlu0.c.b16.cont [6/8] 0, 128
        %430 = vxpose.xlu0.c.b16.cont [7/8] 0, 128
        %431 = vxpose.xlu0.c.b16.end [8/8] 0, 128
        %v432 = vpop.trf.xlu0
        %v433 = vpop.trf.xlu0
        %v434 = vpop.trf.xlu0
        %v435 = vpop.trf.xlu0
        %v436 = vpop.trf.xlu0
        %v437 = vpop.trf.xlu0
        %v438 = vpop.trf.xlu0
        %v439 = vpop.trf.xlu0
        %vm440 = vcmask 64512
        %v442 = vsel %vm440, %v432, 0
        %vm444 = vcmask 1043456
        %v446 = vsel %vm444, %v422, 0
        %v449 = vsel %vm444, %v423, 0
        %451 = vmatprep.subr.bf16.mxu0 %v449
        %452 = vmatpush1.bf16.msra.mxu0 %v446
        %453 = vmatprep.subr.bf16.mxu0 0
        %454 = vmatpush1.bf16.msra.mxu0 0
        %455 = vmatprep.subr.bf16.mxu0 0
        %456 = vmatpush1.bf16.msra.mxu0 0
        %457 = vmatprep.subr.bf16.mxu0 0
        %458 = vmatpush1.bf16.msra.mxu0 0
        %459 = vmatprep.subr.bf16.mxu0 0
        %460 = vmatpush1.bf16.msra.mxu0 0
        %461 = vmatprep.subr.bf16.mxu0 0
        %462 = vmatpush1.bf16.msra.mxu0 0
        %463 = vmatprep.subr.bf16.mxu0 0
        %464 = vmatpush1.bf16.msra.mxu0 0
        %465 = vmatprep.subr.bf16.mxu0 0
        %466 = vmatpush1.bf16.msra.mxu0 0
        %467 = vmatprep.subr.bf16.mxu0 0
        %468 = vmatpush1.bf16.msra.mxu0 0
        %469 = vmatprep.subr.bf16.mxu0 0
        %470 = vmatpush1.bf16.msra.mxu0 0
        %471 = vmatprep.subr.bf16.mxu0 0
        %472 = vmatpush1.bf16.msra.mxu0 0
        %473 = vmatprep.subr.bf16.mxu0 0
        %474 = vmatpush1.bf16.msra.mxu0 0
        %475 = vmatprep.subr.bf16.mxu0 0
        %476 = vmatpush1.bf16.msra.mxu0 0
        %477 = vmatprep.subr.bf16.mxu0 0
        %478 = vmatpush1.bf16.msra.mxu0 0
        %479 = vmatprep.subr.bf16.mxu0 0
        %480 = vmatpush1.bf16.msra.mxu0 0
        %481 = vmatprep.subr.bf16.mxu0 0
        %482 = vmatpush1.bf16.msra.mxu0 0
        %483 = vmatprep.mubr.bf16.mxu0 0
        %484 = vmatmul.mubr.bf16.gmra.mrb[0].mxu0 %v442
        %v485 = vpop.f32.mrb[0].mxu0
        %v486 = vadd.f32 0.0, %v485
        %v487 = vpop.f32.mrb[0].mxu0
        %v488 = vadd.f32 0.0, %v487
        %v489 = vpop.f32.mrb[0].mxu0
        %v490 = vadd.f32 0.0, %v489
        %v491 = vpop.f32.mrb[0].mxu0
        %v492 = vadd.f32 0.0, %v491
        %493 = vdwg.mxu0
        %v494 = vmax.f32 %v486, %v490
        %v495 = vrot.slane %v494, 4
        %v496 = vmax.f32 %v494, %v495
        %v497 = vrot.slane %v496, 2
        %v498 = vmax.f32 %v496, %v497
        %v499 = vrot.slane %v498, 1
        %v500 = vmax.f32 %v498, %v499
        %v501 = vmax.f32 %v488, %v492
        %v502 = vrot.slane %v501, 4
        %v503 = vmax.f32 %v501, %v502
        %v504 = vrot.slane %v503, 2
        %v505 = vmax.f32 %v503, %v504
        %v506 = vrot.slane %v505, 1
        %v507 = vmax.f32 %v505, %v506
        %v508 = vsub.f32 %v486, %v500
        %v509 = vsub.f32 %v488, %v507
        %v510 = vsub.f32 %v490, %v500
        %v511 = vsub.f32 %v492, %v507
        %v512 = vmul.f32 %v508, 1.442695
        %v513 = vpow.pop %v512
        %v514 = vmul.f32 %v509, 1.442695
        %v515 = vpow.pop %v514
        %v516 = vmul.f32 %v510, 1.442695
        %v517 = vpow.pop %v516
        %v518 = vmul.f32 %v511, 1.442695
        %v519 = vpow.pop %v518
        %v520 = vadd.f32 %v513, %v517
        %v521 = vrot.slane %v520, 4
        %v522 = vadd.f32 %v520, %v521
        %v523 = vrot.slane %v522, 2
        %v524 = vadd.f32 %v522, %v523
        %v525 = vrot.slane %v524, 1
        %v526 = vadd.f32 %v524, %v525
        %v527 = vadd.f32 %v515, %v519
        %v528 = vrot.slane %v527, 4
        %v529 = vadd.f32 %v527, %v528
        %v530 = vrot.slane %v529, 2
        %v531 = vadd.f32 %v529, %v530
        %v532 = vrot.slane %v531, 1
        %v533 = vadd.f32 %v531, %v532
        %v534 = vrcp.pop %v526
        %v535 = vrcp.pop %v533
        %v536 = vpack.c.bf16 %v517, %v513
        %v537 = vpack.c.bf16 %v519, %v515
        %vm538 = vcmask 130048
        %v540 = vsel %vm538, %v421, 0
        %542 = vmatprep.subr.bf16.mxu0 %v537
        %543 = vmatpush1.bf16.msra.mxu0 %v536
        %544 = vmatprep.subr.bf16.mxu0 0
        %545 = vmatpush1.bf16.msra.mxu0 0
        %546 = vmatprep.subr.bf16.mxu0 0
        %547 = vmatpush1.bf16.msra.mxu0 0
        %548 = vmatprep.subr.bf16.mxu0 0
        %549 = vmatpush1.bf16.msra.mxu0 0
        %550 = vmatprep.subr.bf16.mxu0 0
        %551 = vmatpush1.bf16.msra.mxu0 0
        %552 = vmatprep.subr.bf16.mxu0 0
        %553 = vmatpush1.bf16.msra.mxu0 0
        %554 = vmatprep.subr.bf16.mxu0 0
        %555 = vmatpush1.bf16.msra.mxu0 0
        %556 = vmatprep.subr.bf16.mxu0 0
        %557 = vmatpush1.bf16.msra.mxu0 0
        %558 = vmatprep.subr.bf16.mxu0 0
        %559 = vmatpush1.bf16.msra.mxu0 0
        %560 = vmatprep.subr.bf16.mxu0 0
        %561 = vmatpush1.bf16.msra.mxu0 0
        %562 = vmatprep.subr.bf16.mxu0 0
        %563 = vmatpush1.bf16.msra.mxu0 0
        %564 = vmatprep.subr.bf16.mxu0 0
        %565 = vmatpush1.bf16.msra.mxu0 0
        %566 = vmatprep.subr.bf16.mxu0 0
        %567 = vmatpush1.bf16.msra.mxu0 0
        %568 = vmatprep.subr.bf16.mxu0 0
        %569 = vmatpush1.bf16.msra.mxu0 0
        %570 = vmatprep.subr.bf16.mxu0 0
        %571 = vmatpush1.bf16.msra.mxu0 0
        %572 = vmatprep.subr.bf16.mxu0 0
        %573 = vmatpush1.bf16.msra.mxu0 0
        %574 = vmatprep.mubr.bf16.mxu0 0
        %575 = vmatmul.mubr.bf16.gmra.mrb[0].mxu0 %v540
        %v576 = vpop.f32.mrb[0].mxu0
        %v577 = vadd.f32 0.0, %v576
        %v578 = vpop.f32.mrb[0].mxu0
        %v579 = vadd.f32 0.0, %v578
        %v580 = vpop.f32.mrb[0].mxu0
        %v581 = vpop.f32.mrb[0].mxu0
        %582 = vdwg.mxu0
        %v583 = vmul.f32 %v577, %v534
        %v584 = vmul.f32 %v579, %v535
        %v585 = vadd.f32 %v583, %v367
        %v586 = vadd.f32 %v584, %v368
        %v587 = vpack.c.bf16 %v585, %v585
        %v588 = vpack.c.bf16 %v586, %v586
        %v591 = vunpack.c.l.b16 %v587
        %v592 = vunpack.c.l.b16 %v588
        %v593 = vpack.c.b16 %v592, %v591
        %595 = vst [vmem:[%s282] sm:$0xff] %v593
        %s596 = sand.u32 %s180, 1
        %s597 = scalar_lea.sflag [#allocation3], %s596
        %s598 = sand.u32 %s180, 1
        %s599 = smul.addr %s598, 8
        %s600 = scalar_lea.vmem [#allocation2], %s599
        // Predicated region
        $region45: #{tpu_custom_call.1} parent=43 // pred_check
          %p601 = pneg %p190
        $region46: #{tpu_custom_call.1} parent=43 // pred_check_branch
          %603 = sbr.rel (%p601) target = $region48
        $region47: #{tpu_custom_call.1} parent=43 // pred_region
          %s604 = smul.u32 2, %s25
          %s606 = ssub.s32 128, 128
          %607 = vsyncadd %s597, %s606
          %s608 = smul.addr %s24, 2
          %s609 = sadd.s32 %s604, %s608
          %s610 = smul.addr %s609, 64
          %s611 = scalar_lea.hbm %s6, %s610
          %s613 = sshll.u32 %s600, 4
          %s614 = int_to_ptr.vmem [resolvable:$true] %s613
          %616 = dma.vmem_to_hbm [thread:$0]  %s614, 128, %s611, %s597
        $region48: #{tpu_custom_call.1} parent=43 // pred_fallthru
          _
      $region44: #{tpu_custom_call.1} parent=5 // pred_fallthru
        _
      %p617 = scmp.le.s32.totalorder 2, %s15
      // Predicated region
      $region49: #{tpu_custom_call.1} parent=5 // pred_check
        %p618 = pneg %p617
      $region50: #{tpu_custom_call.1} parent=5 // pred_check_branch
        %620 = sbr.rel (%p618) target = $region52
      $region51: #{tpu_custom_call.1} parent=5 // pred_region
        %s621 = ssub.s32 %s15, 2
        // Predicated region
        $region53: #{tpu_custom_call.1} parent=51 // pred_check
          %p622 = pneg %p196
        $region54: #{tpu_custom_call.1} parent=51 // pred_check_branch
          %624 = sbr.rel (%p622) target = $region56
        $region55: #{tpu_custom_call.1} parent=51 // pred_region
          %s625 = sand.u32 %s181, 1
          %s626 = scalar_lea.sflag [#allocation3], %s625
          %s627 = sand.u32 %s181, 1
          %s628 = smul.addr %s627, 8
          %s629 = scalar_lea.vmem [#allocation2], %s628
          %630 = dma.done %s626, 128
        $region56: #{tpu_custom_call.1} parent=51 // pred_fallthru
          _
      $region52: #{tpu_custom_call.1} parent=5 // pred_fallthru
        _
    $region6: #{tpu_custom_call.1} parent=1 // loop_footer
      %s19 = sadd.s32 1, %s15
    $region7: #{tpu_custom_call.1} parent=1 // loop_footer_branch
      %14 = sbr.rel target = $region3
    $region8: #{tpu_custom_call.1} parent=1 // loop_exit
      _
    %631 = vsyncpa [#allocation3], 1
    %s632 = scalar_lea.sflag [#allocation3], 1
    %633 = vsyncpa %s632, 1

</llo_original>
